<compile_context>
chip_gen: v7x
topology: tpu7x:2x2x1
jax: 0.10.0
libtpu: 0.0.40
codegen_flags: <defaults>
</compile_context>

<pallas_src>
import jax
import jax.numpy as jnp
from jax.experimental import pallas as pl
from jax.experimental.pallas import tpu as pltpu


def _head_kernel(x_ref, w_ref, b_ref, o_ref):
    # x_ref: [TB, D] (any float dtype), w_ref: [D, n_out] f32,
    # b_ref: [1, n_out] f32, o_ref: [TB, n_out] f32
    x = x_ref[...].astype(jnp.float32)

    # F.normalize(x, p=2, dim=1, eps=1e-12):  x / max(||x||, eps)
    # == x * rsqrt(max(||x||^2, eps^2)); the scale is applied after the matmul.
    sq = jnp.sum(x * x, axis=-1, keepdims=True)          # [TB, 1]
    inv = jax.lax.rsqrt(jnp.maximum(sq, 1e-24))           # [TB, 1]

    # Fused (Linear -> Dropout[identity] -> Linear) as a single matmul.
    h = jnp.dot(x, w_ref[...], preferred_element_type=jnp.float32)  # [TB, n_out]

    o_ref[...] = (h * inv + b_ref[...]).astype(o_ref.dtype)


def model_head(x1, w1, b1, w2, b2, *, block_rows=1024):
    """Pallas kernel for the downstream head.

    x1: [B, D] encoder output (f32 or bf16)
    w1: [D, 64], b1: [64], w2: [64, n_output], b2: [n_output]
    Returns out of shape [B * n_output] (the .reshape(-1) of the PyTorch module).
    """
    B, D = x1.shape
    n_out = w2.shape[1]

    # Fuse the two linear layers once, in plain XLA (Dropout is identity at
    # inference and there is no nonlinearity between the two Linears).
    w1f = w1.astype(jnp.float32)
    w2f = w2.astype(jnp.float32)
    w_fused = w1f @ w2f                                            # [D, n_out]
    b_fused = (b1.astype(jnp.float32) @ w2f
               + b2.astype(jnp.float32)).reshape(1, n_out)          # [1, n_out]

    # Batch tiling: single full block for small B, 1024-row tiles otherwise.
    TB = B if B <= block_rows else block_rows
    grid = (pl.cdiv(B, TB),)

    out2d = pl.pallas_call(
        _head_kernel,
        out_shape=jax.ShapeDtypeStruct((B, n_out), jnp.float32),
        grid=grid,
        in_specs=[
            pl.BlockSpec((TB, D), lambda i: (i, 0)),       # x tile (pipelined)
            pl.BlockSpec((D, n_out), lambda i: (0, 0)),    # fused weight (pinned)
            pl.BlockSpec((1, n_out), lambda i: (0, 0)),    # fused bias (pinned)
        ],
        out_specs=pl.BlockSpec((TB, n_out), lambda i: (i, 0)),
        compiler_params=pltpu.CompilerParams(
            dimension_semantics=("parallel",),             # v7x: 2 TCs split grid
        ),
    )(x1, w_fused, b_fused)

    return out2d.reshape(-1)


def model_forward(x1, y, params):
    """Equivalent of Model.forward given the encoder output x1 and labels y."""
    out = model_head(x1, params["w1"], params["b1"], params["w2"], params["b2"])
    return out, y


def _reference(x1, params):
    # Plain-JAX reference: normalize -> Linear -> (dropout identity) -> Linear.
    x1 = x1.astype(jnp.float32)
    xc = x1 / jnp.maximum(jnp.linalg.norm(x1, axis=1, keepdims=True), 1e-12)
    h = xc @ params["w1"].astype(jnp.float32) + params["b1"].astype(jnp.float32)
    out = h @ params["w2"].astype(jnp.float32) + params["b2"].astype(jnp.float32)
    return out.reshape(-1)


if __name__ == "__main__":
    output_dim = 128   # encoder embedding dim (matches nn.Linear(output_dim, 64))
    hidden = 64
    n_output = 1

    key = jax.random.PRNGKey(0)
    k_x, k_w1, k_b1, k_w2, k_b2, k_y, k_x2 = jax.random.split(key, 7)

    # PyTorch-Linear-like uniform init bounds.
    bound1 = 1.0 / jnp.sqrt(output_dim)
    bound2 = 1.0 / jnp.sqrt(hidden)
    params = {
        "w1": jax.random.uniform(k_w1, (output_dim, hidden), jnp.float32, -bound1, bound1),
        "b1": jax.random.uniform(k_b1, (hidden,), jnp.float32, -bound1, bound1),
        "w2": jax.random.uniform(k_w2, (hidden, n_output), jnp.float32, -bound2, bound2),
        "b2": jax.random.uniform(k_b2, (n_output,), jnp.float32, -bound2, bound2),
    }

    # --- Test 1: small batch (single block, full-array tile) ---------------
    B = 8
    x1 = jax.random.normal(k_x, (B, output_dim), dtype=jnp.float32)
    y = jax.random.normal(k_y, (B,), dtype=jnp.float32)

    out, y_out = model_forward(x1, y, params)
    out = jax.block_until_ready(out)
    ref = _reference(x1, params)
    assert out.shape == (B * n_output,)
    assert jnp.allclose(out, ref, atol=1e-4, rtol=1e-4)

    # --- Test 2: exercise the batch grid + ragged last tile ----------------
    B2 = 40
    x2 = jax.random.normal(k_x2, (B2, output_dim), dtype=jnp.float32)
    out2 = model_head(x2, params["w1"], params["b1"], params["w2"], params["b2"],
                      block_rows=16)        # grid = 3 steps, last tile masked
    out2 = jax.block_until_ready(out2)
    ref2 = _reference(x2, params)
    assert out2.shape == (B2 * n_output,)
    assert jnp.allclose(out2, ref2, atol=1e-4, rtol=1e-4)

    print("KERNEL_OK")
</pallas_src>

<mosaic_0001>
module attributes {stable_mosaic.version = 11 : i64} {
  func.func @_head_kernel(%arg0: i32, %arg1: memref<8x128xf32, #tpu.memory_space<vmem>>, %arg2: memref<128x1xf32, #tpu.memory_space<vmem>>, %arg3: memref<1x1xf32, #tpu.memory_space<vmem>>, %arg4: memref<8x1xf32, #tpu.memory_space<vmem>>) attributes {dimension_semantics = [#tpu.dimension_semantics<parallel>], iteration_bounds = array<i64: 1>, scalar_prefetch = 0 : i64, scratch_operands = 0 : i64, tpu.core_type = #tpu.core_type<tc>, window_params = [{transform_indices = @transform_0, window_bounds = array<i64: 8, 128>}, {pipeline_mode = #tpu.pipeline_mode<synchronous>, transform_indices = @transform_1, window_bounds = array<i64: 128, 1>}, {pipeline_mode = #tpu.pipeline_mode<synchronous>, transform_indices = @transform_2, window_bounds = array<i64: 1, 1>}, {transform_indices = @transform_3, window_bounds = array<i64: 8, 1>}]} {
    %c0 = arith.constant 0 : index
    %c0_0 = arith.constant 0 : index
    %0 = vector.load %arg1[%c0, %c0_0] : memref<8x128xf32, #tpu.memory_space<vmem>>, vector<8x128xf32>
    %1 = arith.mulf %0, %0 : vector<8x128xf32>
    %cst = arith.constant dense<0.000000e+00> : vector<8xf32>
    %2 = vector.multi_reduction <add>, %1, %cst [1] : vector<8x128xf32> to vector<8xf32>
    %3 = vector.shape_cast %2 : vector<8xf32> to vector<8x1xf32>
    %cst_1 = arith.constant 1.000000e-24 : f32
    %4 = vector.broadcast %cst_1 : f32 to vector<8x1xf32>
    %5 = arith.maximumf %3, %4 : vector<8x1xf32>
    %6 = math.rsqrt %5 : vector<8x1xf32>
    %c0_2 = arith.constant 0 : index
    %c0_3 = arith.constant 0 : index
    %7 = vector.load %arg2[%c0_2, %c0_3] : memref<128x1xf32, #tpu.memory_space<vmem>>, vector<128x1xf32>
    %cst_4 = arith.constant dense<0.000000e+00> : vector<8x1xf32>
    %8 = tpu.matmul %0, %7, %cst_4 {dimension_numbers = #tpu.dot_dimension_numbers<[1], [0], [0], [1], [0, 0, 1, 1], [], []>} : vector<8x128xf32>, vector<128x1xf32>, vector<8x1xf32> -> vector<8x1xf32>
    %9 = arith.mulf %8, %6 : vector<8x1xf32>
    %c0_5 = arith.constant 0 : index
    %c0_6 = arith.constant 0 : index
    %10 = vector.load %arg3[%c0_5, %c0_6] : memref<1x1xf32, #tpu.memory_space<vmem>>, vector<1x1xf32>
    %11 = vector.broadcast %10 : vector<1x1xf32> to vector<8x1xf32>
    %12 = arith.addf %9, %11 : vector<8x1xf32>
    %c0_7 = arith.constant 0 : index
    %c0_8 = arith.constant 0 : index
    %13 = vector.load %arg4[%c0_7, %c0_8] : memref<8x1xf32, #tpu.memory_space<vmem>>, vector<8x1xf32>
    tpu.vector_store %arg4[%c0_7, %c0_8], %12 {strides = array<i32>} : memref<8x1xf32, #tpu.memory_space<vmem>>, vector<8x1xf32>,
    return
  }
  func.func @transform_0(%arg0: i32) -> (i32, i32) {
    %c0_i32 = arith.constant 0 : i32
    %c0_i32_0 = arith.constant 0 : i32
    return %arg0, %c0_i32 : i32, i32
  }
  func.func @transform_1(%arg0: i32) -> (i32, i32) {
    %c0_i32 = arith.constant 0 : i32
    %c0_i32_0 = arith.constant 0 : i32
    %c0_i32_1 = arith.constant 0 : i32
    return %c0_i32, %c0_i32_0 : i32, i32
  }
  func.func @transform_2(%arg0: i32) -> (i32, i32) {
    %c0_i32 = arith.constant 0 : i32
    %c0_i32_0 = arith.constant 0 : i32
    %c0_i32_1 = arith.constant 0 : i32
    return %c0_i32, %c0_i32_0 : i32, i32
  }
  func.func @transform_3(%arg0: i32) -> (i32, i32) {
    %c0_i32 = arith.constant 0 : i32
    %c0_i32_0 = arith.constant 0 : i32
    return %arg0, %c0_i32 : i32, i32
  }
}

</mosaic_0001>

<llo_original>
// kernel: tpu_custom_call.1
$region0: #{tpu_custom_call.1}
  #allocation0 [shape = 'u32[]', space=smem, size = 0x4, offset = 0x4, fixed_abs, tag = 'smem constant byte address 0x4 - core index']
  #allocation1 [shape = 'u32[144,128]{1,0:T(1,128)}', space=vmem, size = 0x12000, scoped, tag = 'internal scratch']
  #allocation2 [shape = 'f32[1,1]{1,0:T(1,128)S(1)}', space=vmem, size = 0x200, scoped, tag = 'scoped memory for tpu_custom_call.1']
  %s0 = inlined_call_operand.vmem [shape: f32[8,128], index: 0, kind: input, shape index: {}]
  %s1 = inlined_call_operand.vmem [shape: f32[128,1], index: 1, kind: input, shape index: {}]
  %s2 = inlined_call_operand.<no memory space> [shape: f32[1,1], index: 2, kind: input, shape index: {}]
  %s3 = inlined_call_operand.vmem [shape: f32[8,1], index: 3, kind: output, shape index: {}]
  %s4 = sld [smem:[#allocation0]]
  $region22: #{tpu_custom_call.1} parent=0
    _
  %s6 = ssub.s32 1, %s4
  %s7 = scalar_select 0, %s6, %s4
  %v8 = vstv %s2
  %9 = vst [vmem:[#allocation2] sm:$0x1] %v8
  // Predicated region
  $region2: #{tpu_custom_call.1} parent=0 // pred_check
    _
  $region3: #{tpu_custom_call.1} parent=0 // pred_check_branch
    %11 = sbr.rel (0) target = $region5
  $region4: #{tpu_custom_call.1} parent=0 // pred_region
    _
  $region5: #{tpu_custom_call.1} parent=0 // pred_fallthru
    _
  // Predicated region
  $region6: #{tpu_custom_call.1} parent=0 // pred_check
    _
  $region7: #{tpu_custom_call.1} parent=0 // pred_check_branch
    %13 = sbr.rel (0) target = $region9
  $region8: #{tpu_custom_call.1} parent=0 // pred_region
    _
  $region9: #{tpu_custom_call.1} parent=0 // pred_fallthru
    _
  // Predicated region
  $region10: #{tpu_custom_call.1} parent=0 // pred_check
    _
  $region11: #{tpu_custom_call.1} parent=0 // pred_check_branch
    %15 = sbr.rel (0) target = $region13
  $region12: #{tpu_custom_call.1} parent=0 // pred_region
    _
  $region13: #{tpu_custom_call.1} parent=0 // pred_fallthru
    _
  %v16 = vld [vmem:[%s0] sm:$0xff]
  %v17 = vmul.f32 %v16, %v16
  %18 = vadd.xlane.f32.xlu0 %v17
  %v19 = vpop.xlane.xlu0 %18
  %v20 = vmax.f32 %v19, 1e-24
  %v21 = vrsqrt.pop %v20
  %v22 = vld [vmem:[%s1] sm:$0xff]
  %v23 = vld [vmem:[%s1 + $0x8] sm:$0xff]
  %v24 = vld [vmem:[%s1 + $0x10] sm:$0xff]
  %v25 = vld [vmem:[%s1 + $0x18] sm:$0xff]
  %v26 = vld [vmem:[%s1 + $0x20] sm:$0xff]
  %v27 = vld [vmem:[%s1 + $0x28] sm:$0xff]
  %v28 = vld [vmem:[%s1 + $0x30] sm:$0xff]
  %v29 = vld [vmem:[%s1 + $0x38] sm:$0xff]
  %v30 = vld [vmem:[%s1 + $0x40] sm:$0xff]
  %v31 = vld [vmem:[%s1 + $0x48] sm:$0xff]
  %v32 = vld [vmem:[%s1 + $0x50] sm:$0xff]
  %v33 = vld [vmem:[%s1 + $0x58] sm:$0xff]
  %v34 = vld [vmem:[%s1 + $0x60] sm:$0xff]
  %v35 = vld [vmem:[%s1 + $0x68] sm:$0xff]
  %v36 = vld [vmem:[%s1 + $0x70] sm:$0xff]
  %v37 = vld [vmem:[%s1 + $0x78] sm:$0xff]
  %38 = vmatprep.subr.mxu0 0.0
  %39 = vmatpush1.msra.mxu0 %v22
  %40 = vmatprep.subr.mxu0 0.0
  %41 = vmatpush1.msra.mxu0 %v23
  %42 = vmatprep.subr.mxu0 0.0
  %43 = vmatpush1.msra.mxu0 %v24
  %44 = vmatprep.subr.mxu0 0.0
  %45 = vmatpush1.msra.mxu0 %v25
  %46 = vmatprep.subr.mxu0 0.0
  %47 = vmatpush1.msra.mxu0 %v26
  %48 = vmatprep.subr.mxu0 0.0
  %49 = vmatpush1.msra.mxu0 %v27
  %50 = vmatprep.subr.mxu0 0.0
  %51 = vmatpush1.msra.mxu0 %v28
  %52 = vmatprep.subr.mxu0 0.0
  %53 = vmatpush1.msra.mxu0 %v29
  %54 = vmatprep.subr.mxu0 0.0
  %55 = vmatpush1.msra.mxu0 %v30
  %56 = vmatprep.subr.mxu0 0.0
  %57 = vmatpush1.msra.mxu0 %v31
  %58 = vmatprep.subr.mxu0 0.0
  %59 = vmatpush1.msra.mxu0 %v32
  %60 = vmatprep.subr.mxu0 0.0
  %61 = vmatpush1.msra.mxu0 %v33
  %62 = vmatprep.subr.mxu0 0.0
  %63 = vmatpush1.msra.mxu0 %v34
  %64 = vmatprep.subr.mxu0 0.0
  %65 = vmatpush1.msra.mxu0 %v35
  %66 = vmatprep.subr.mxu0 0.0
  %67 = vmatpush1.msra.mxu0 %v36
  %68 = vmatprep.subr.mxu0 0.0
  %69 = vmatpush1.msra.mxu0 %v37
  %70 = vmatprep.subr.mxu0 0.0
  %71 = vmatpush1.msra.mxu0 0.0
  %72 = vmatprep.subr.mxu0 0.0
  %73 = vmatpush1.msra.mxu0 0.0
  %74 = vmatprep.subr.mxu0 0.0
  %75 = vmatpush1.msra.mxu0 0.0
  %76 = vmatprep.subr.mxu0 0.0
  %77 = vmatpush1.msra.mxu0 0.0
  %78 = vmatprep.subr.mxu0 0.0
  %79 = vmatpush1.msra.mxu0 0.0
  %80 = vmatprep.subr.mxu0 0.0
  %81 = vmatpush1.msra.mxu0 0.0
  %82 = vmatprep.subr.mxu0 0.0
  %83 = vmatpush1.msra.mxu0 0.0
  %84 = vmatprep.subr.mxu0 0.0
  %85 = vmatpush1.msra.mxu0 0.0
  %86 = vmatprep.subr.mxu0 0.0
  %87 = vmatpush1.msra.mxu0 0.0
  %88 = vmatprep.subr.mxu0 0.0
  %89 = vmatpush1.msra.mxu0 0.0
  %90 = vmatprep.subr.mxu0 0.0
  %91 = vmatpush1.msra.mxu0 0.0
  %92 = vmatprep.subr.mxu0 0.0
  %93 = vmatpush1.msra.mxu0 0.0
  %94 = vmatprep.subr.mxu0 0.0
  %95 = vmatpush1.msra.mxu0 0.0
  %96 = vmatprep.subr.mxu0 0.0
  %97 = vmatpush1.msra.mxu0 0.0
  %98 = vmatprep.subr.mxu0 0.0
  %99 = vmatpush1.msra.mxu0 0.0
  %100 = vmatprep.subr.mxu0 0.0
  %101 = vmatpush1.msra.mxu0 0.0
  %102 = vmatprep.mubr.f32.mxu0 0.0
  %103 = vmatmul.mubr.f32.gmra.mrb[0].mxu0 %v16
  %v104 = vpop.f32.mrb[0].mxu0
  %v105 = vadd.f32 0.0, %v104
  %v106 = vpop.f32.mrb[0].mxu0
  %107 = vdwg.mxu0
  %v108 = vmul.f32 %v105, %v21
  %v109 = vld [vmem:[#allocation2] sm:$0x1]
  %v111 = vlaneseq
  %v112 = vshrl.u32 %v111, 7
  %v113 = vsub.s32 0, %v112
  %v114 = vrot.slane %v109, %v113
  %v116 = vadd.f32 %v108, %v114
  %vm117 = vcmask 7168
  %118 = vst.msk [vmem:[%s3] sm:$0xff] %vm117, %v116
  // Predicated region
  $region14: #{tpu_custom_call.1} parent=0 // pred_check
    _
  $region15: #{tpu_custom_call.1} parent=0 // pred_check_branch
    %120 = sbr.rel (0) target = $region17
  $region16: #{tpu_custom_call.1} parent=0 // pred_region
    _
  $region17: #{tpu_custom_call.1} parent=0 // pred_fallthru
    _
  // Predicated region
  $region18: #{tpu_custom_call.1} parent=0 // pred_check
    _
  $region19: #{tpu_custom_call.1} parent=0 // pred_check_branch
    %122 = sbr.rel (0) target = $region21
  $region20: #{tpu_custom_call.1} parent=0 // pred_region
    _
  $region21: #{tpu_custom_call.1} parent=0 // pred_fallthru
    _

</llo_original>
